<compile_context>
chip_gen: v7x
topology: tpu7x:2x2x1
jax: 0.10.0
libtpu: 0.0.40
codegen_flags: <defaults>
</compile_context>

<pallas_src>
import jax
import jax.numpy as jnp
import numpy as np
from jax.experimental import pallas as pl
from jax.experimental.pallas import tpu as pltpu


# ---------------------------------------------------------------------------
# Tiling helpers
# ---------------------------------------------------------------------------
def _round_up(x, m):
    return ((x + m - 1) // m) * m


def _choose_token_tile(T):
    # 256 keeps the v6e/v7x 256x256 MXU full; small problems use an 8-aligned tile.
    if T >= 256:
        return 256
    return max(8, _round_up(T, 8))


def _choose_inner_tile(I):
    # Block last-dims must be multiples of 128 or the full extent.
    if I % 512 == 0 and I > 512:
        return 512
    return I


# ---------------------------------------------------------------------------
# Grouped expert kernel.
# grid = (num_token_tiles, num_I_tiles); the expert id of token tile t is
# scalar-prefetched (te_ref) and drives the weight index_maps, so each token
# tile streams only its own expert's weights.  The intermediate (I) axis is a
# reduction for the down projection -> f32 scratch accumulator (P3 pattern).
# ---------------------------------------------------------------------------
def _moe_grouped_kernel(te_ref, x_ref, gw_ref, uw_ref, dw_ref, o_ref, acc_ref):
    del te_ref  # only consumed by the index_maps
    i = pl.program_id(1)

    @pl.when(i == 0)
    def _():
        acc_ref[...] = jnp.zeros_like(acc_ref)

    x = x_ref[...]                                                      # (tT, H) bf16
    g = jnp.dot(x, gw_ref[0], preferred_element_type=jnp.float32)      # (tT, tI) f32
    u = jnp.dot(x, uw_ref[0], preferred_element_type=jnp.float32)      # (tT, tI) f32
    h = (jax.nn.silu(g) * u).astype(jnp.bfloat16)                      # f32 VPU/EUP, bf16 for MXU
    acc_ref[...] += jnp.dot(h, dw_ref[0], preferred_element_type=jnp.float32)

    @pl.when(i == pl.num_programs(1) - 1)
    def _():
        o_ref[...] = acc_ref[...].astype(o_ref.dtype)


def moe_experts_grouped(x_pad, gate_w, up_w, down_w, tile_expert, *, tT, tI):
    """x_pad: (T_cap, H) bf16 (tokens grouped by expert, per-group padded).
    gate_w/up_w: (E, H, I) bf16; down_w: (E, I, H) bf16; tile_expert: (T_cap//tT,) i32.
    Returns (T_cap, H) f32."""
    T_cap, H = x_pad.shape
    E, _, I = gate_w.shape
    num_t = T_cap // tT
    num_i = I // tI

    cost = pl.CostEstimate(
        flops=6 * T_cap * H * I,                  # gate + up + down matmuls
        transcendentals=T_cap * I,                # silu
        bytes_accessed=min(num_t, E) * 3 * H * I * 2 + T_cap * H * (2 + 4),
    )

    return pl.pallas_call(
        _moe_grouped_kernel,
        out_shape=jax.ShapeDtypeStruct((T_cap, H), jnp.float32),
        grid_spec=pltpu.PrefetchScalarGridSpec(
            num_scalar_prefetch=1,
            grid=(num_t, num_i),
            in_specs=[
                pl.BlockSpec((tT, H), lambda t, i, te: (t, 0)),
                pl.BlockSpec((1, H, tI), lambda t, i, te: (te[t], 0, i)),
                pl.BlockSpec((1, H, tI), lambda t, i, te: (te[t], 0, i)),
                pl.BlockSpec((1, tI, H), lambda t, i, te: (te[t], i, 0)),
            ],
            out_specs=pl.BlockSpec((tT, H), lambda t, i, te: (t, 0)),
            scratch_shapes=[pltpu.VMEM((tT, H), jnp.float32)],
        ),
        compiler_params=pltpu.CompilerParams(
            dimension_semantics=("parallel", "arbitrary"),
            vmem_limit_bytes=64 * 1024 * 1024,
        ),
        cost_estimate=cost,
    )(tile_expert, x_pad, gate_w, up_w, down_w)


# ---------------------------------------------------------------------------
# Full SBaseMoE forward (eval mode).  Routing, sorting/grouping, and the final
# max_prob scaling are plain XLA; the heavy per-expert GLU MLP is the Pallas
# kernel above.
# ---------------------------------------------------------------------------
@jax.jit
def sbase_moe_forward(hidden_states, params):
    B, S, H = hidden_states.shape
    E = params["router_w"].shape[1]
    I = params["gate_w"].shape[2]
    x = hidden_states.reshape(-1, H)                       # (T, H)
    T = x.shape[0]

    # Router: tiny (T,H)x(H,E) matmul with lane-sparse (E << 128) output ->
    # left to XLA per perf review.
    route = jax.nn.sigmoid(x @ params["router_w"])         # (T, E) f32
    max_prob = jnp.max(route, axis=1)                      # (T,)
    max_ind = jnp.argmax(route, axis=1).astype(jnp.int32)  # (T,), first-max like torch

    tT = _choose_token_tile(T)
    tI = _choose_inner_tile(I)
    T_cap = _round_up(T + E * (tT - 1), tT)                # static capacity incl. padding
    num_t = T_cap // tT

    # ---- group tokens by expert (sorted; each group padded to a tile multiple)
    counts = jnp.bincount(max_ind, length=E).astype(jnp.int32)          # (E,)
    starts = (jnp.cumsum(counts) - counts).astype(jnp.int32)
    padded_counts = ((counts + tT - 1) // tT) * tT
    padded_starts = (jnp.cumsum(padded_counts) - padded_counts).astype(jnp.int32)
    total_padded = jnp.sum(padded_counts)

    sort_idx = jnp.argsort(max_ind)                                      # (T,)
    sorted_expert = max_ind[sort_idx]
    rank = jnp.arange(T, dtype=jnp.int32) - starts[sorted_expert]
    dest = padded_starts[sorted_expert] + rank                           # (T,) unique

    x_pad = jnp.zeros((T_cap, H), jnp.bfloat16).at[dest].set(
        x[sort_idx].astype(jnp.bfloat16))

    # Expert id per token tile.  Tiles past the used region reuse the last
    # active expert so they trigger no extra weight DMA (their rows are zero
    # and their outputs are never gathered back).
    row0 = jnp.arange(num_t, dtype=jnp.int32) * tT
    ends = padded_starts + padded_counts
    tile_expert_raw = jnp.sum(row0[:, None] >= ends[None, :], axis=1).astype(jnp.int32)
    last_active = jnp.max(jnp.where(counts > 0, jnp.arange(E, dtype=jnp.int32), 0))
    tile_expert = jnp.where(row0 < total_padded,
                            jnp.minimum(tile_expert_raw, E - 1),
                            last_active).astype(jnp.int32)

    # bf16 MXU operands (halves HBM weight streaming); accumulation stays f32.
    gate_w = params["gate_w"].astype(jnp.bfloat16)
    up_w = params["up_w"].astype(jnp.bfloat16)
    down_w = params["down_w"].astype(jnp.bfloat16)

    out_pad = moe_experts_grouped(x_pad, gate_w, up_w, down_w, tile_expert,
                                  tT=tT, tI=tI)                          # (T_cap, H) f32

    # Un-group back to original token order and apply the routing probability.
    out = jnp.zeros((T, H), jnp.float32).at[sort_idx].set(out_pad[dest])
    out = out * max_prob[:, None]
    return out.reshape(B, S, H), None


# ---------------------------------------------------------------------------
# Deterministic parameter init (shapes follow the PyTorch module __init__;
# torch Linear(in, out) weight is (out, in) -- we store the transpose).
# ---------------------------------------------------------------------------
def init_params(key, hidden_size, intermediate_size, num_experts):
    ks = jax.random.split(key, 4)
    s = 0.05
    return {
        "router_w": s * jax.random.normal(ks[0], (hidden_size, num_experts), jnp.float32),
        "gate_w": s * jax.random.normal(ks[1], (num_experts, hidden_size, intermediate_size), jnp.float32),
        "up_w": s * jax.random.normal(ks[2], (num_experts, hidden_size, intermediate_size), jnp.float32),
        "down_w": s * jax.random.normal(ks[3], (num_experts, intermediate_size, hidden_size), jnp.float32),
    }


# Pure-JAX reference.  mxu_dtype=jnp.bfloat16 mirrors the kernel's numerics
# (bf16 MXU operands, f32 accumulation); jnp.float32 is the module's math.
def reference_forward(hidden_states, params, mxu_dtype=jnp.float32):
    B, S, H = hidden_states.shape
    E = params["router_w"].shape[1]
    x = hidden_states.reshape(-1, H)
    route = jax.nn.sigmoid(x @ params["router_w"])
    max_prob = jnp.max(route, axis=1, keepdims=True)
    max_ind = jnp.argmax(route, axis=1)
    xm = x.astype(mxu_dtype)
    outs = []
    for e in range(E):
        g = jnp.dot(xm, params["gate_w"][e].astype(mxu_dtype), preferred_element_type=jnp.float32)
        u = jnp.dot(xm, params["up_w"][e].astype(mxu_dtype), preferred_element_type=jnp.float32)
        h = (jax.nn.silu(g) * u).astype(mxu_dtype)
        outs.append(jnp.dot(h, params["down_w"][e].astype(mxu_dtype), preferred_element_type=jnp.float32))
    outs = jnp.stack(outs, axis=0)                      # (E, T, H)
    sel = jnp.take_along_axis(outs, max_ind[None, :, None], axis=0)[0]
    return (sel * max_prob).reshape(B, S, H)


if __name__ == "__main__":
    # Small shapes consistent with the module's forward.
    batch, seq = 2, 8
    hidden_size, intermediate_size, num_experts = 32, 64, 4
    hidden_act = "silu"      # glu_mlp=True, silu gate  # noqa: F841
    glu_mlp = True           # noqa: F841

    key = jax.random.PRNGKey(0)
    k_x, k_p = jax.random.split(key)
    hidden_states = jax.random.normal(k_x, (batch, seq, hidden_size), jnp.float32)
    params = init_params(k_p, hidden_size, intermediate_size, num_experts)

    out, bias = sbase_moe_forward(hidden_states, params)
    out = jax.block_until_ready(out)

    # Tight check vs. a reference using the same bf16-MXU / f32-accumulate math.
    ref_bf16 = reference_forward(hidden_states, params, jnp.bfloat16)
    np.testing.assert_allclose(np.asarray(out), np.asarray(ref_bf16), rtol=1e-4, atol=1e-5)
    # Loose check vs. the full-f32 module semantics (bf16 rounding tolerance).
    ref_f32 = reference_forward(hidden_states, params, jnp.float32)
    np.testing.assert_allclose(np.asarray(out), np.asarray(ref_f32), rtol=3e-2, atol=3e-3)

    assert out.shape == hidden_states.shape and bias is None
    print("KERNEL_OK")
</pallas_src>

<mosaic_0001>
module attributes {stable_mosaic.version = 11 : i64} {
  func.func private @main(%arg0: i32) attributes {dimension_semantics = [#tpu.dimension_semantics<core_parallel>], iteration_bounds = array<i64: 2>, tpu.core_type = #tpu.core_type<sc_scalar_subcore>, window_params = []} {
    return
  }
}

module attributes {stable_mosaic.version = 11 : i64} {
  func.func private @main(%arg0: i32) attributes {dimension_semantics = [#tpu.dimension_semantics<core_parallel>], iteration_bounds = array<i64: 2>, tpu.core_type = #tpu.core_type<sc_scalar_subcore>, window_params = []} {
    return
  }
}

module attributes {stable_mosaic.version = 11 : i64} {
  func.func @_moe_grouped_kernel(%arg0: i32, %arg1: i32, %arg2: memref<5xi32, #tpu.memory_space<smem>>, %arg3: memref<16x32xbf16, #tpu.memory_space<vmem>>, %arg4: memref<1x32x64xbf16, #tpu.memory_space<vmem>>, %arg5: memref<1x32x64xbf16, #tpu.memory_space<vmem>>, %arg6: memref<1x64x32xbf16, #tpu.memory_space<vmem>>, %arg7: memref<16x32xf32, #tpu.memory_space<vmem>>, %arg8: memref<16x32xf32, #tpu.memory_space<vmem>>) attributes {dimension_semantics = [#tpu.dimension_semantics<parallel>, #tpu.dimension_semantics<arbitrary>], iteration_bounds = array<i64: 5, 1>, scalar_prefetch = 1 : i64, scratch_operands = 1 : i64, tpu.core_type = #tpu.core_type<tc>, window_params = [{transform_indices = @transform_0, window_bounds = array<i64: 16, 32>}, {transform_indices = @transform_1, window_bounds = array<i64: 1, 32, 64>}, {transform_indices = @transform_2, window_bounds = array<i64: 1, 32, 64>}, {transform_indices = @transform_3, window_bounds = array<i64: 1, 64, 32>}, {transform_indices = @transform_4, window_bounds = array<i64: 16, 32>}]} {
    %c0_i32 = arith.constant 0 : i32
    %0 = arith.cmpi eq, %arg1, %c0_i32 : i32
    %1 = arith.extui %0 : i1 to i32
    %c0_i32_0 = arith.constant 0 : i32
    %2 = arith.cmpi ne, %1, %c0_i32_0 : i32
    scf.if %2 {
      %cst_20 = arith.constant 0.000000e+00 : f32
      %27 = vector.broadcast %cst_20 : f32 to vector<16x32xf32>
      %c0_21 = arith.constant 0 : index
      %c0_22 = arith.constant 0 : index
      %28 = vector.load %arg8[%c0_21, %c0_22] : memref<16x32xf32, #tpu.memory_space<vmem>>, vector<16x32xf32>
      tpu.vector_store %arg8[%c0_21, %c0_22], %27 {strides = array<i32>} : memref<16x32xf32, #tpu.memory_space<vmem>>, vector<16x32xf32>,
    } else {
    }
    %c0 = arith.constant 0 : index
    %c0_1 = arith.constant 0 : index
    %3 = vector.load %arg3[%c0, %c0_1] : memref<16x32xbf16, #tpu.memory_space<vmem>>, vector<16x32xbf16>
    %c0_2 = arith.constant 0 : index
    %c0_3 = arith.constant 0 : index
    %c0_4 = arith.constant 0 : index
    %4 = vector.load %arg4[%c0_2, %c0_3, %c0_4] : memref<1x32x64xbf16, #tpu.memory_space<vmem>>, vector<1x32x64xbf16>
    %5 = vector.shape_cast %4 : vector<1x32x64xbf16> to vector<32x64xbf16>
    %cst = arith.constant dense<0.000000e+00> : vector<16x64xf32>
    %6 = tpu.matmul %3, %5, %cst {dimension_numbers = #tpu.dot_dimension_numbers<[1], [0], [0], [1], [0, 0, 1, 1], [], []>} : vector<16x32xbf16>, vector<32x64xbf16>, vector<16x64xf32> -> vector<16x64xf32>
    %c0_5 = arith.constant 0 : index
    %c0_6 = arith.constant 0 : index
    %c0_7 = arith.constant 0 : index
    %7 = vector.load %arg5[%c0_5, %c0_6, %c0_7] : memref<1x32x64xbf16, #tpu.memory_space<vmem>>, vector<1x32x64xbf16>
    %8 = vector.shape_cast %7 : vector<1x32x64xbf16> to vector<32x64xbf16>
    %cst_8 = arith.constant dense<0.000000e+00> : vector<16x64xf32>
    %9 = tpu.matmul %3, %8, %cst_8 {dimension_numbers = #tpu.dot_dimension_numbers<[1], [0], [0], [1], [0, 0, 1, 1], [], []>} : vector<16x32xbf16>, vector<32x64xbf16>, vector<16x64xf32> -> vector<16x64xf32>
    %10 = arith.negf %6 : vector<16x64xf32>
    %11 = math.exp %10 : vector<16x64xf32>
    %cst_9 = arith.constant 1.000000e+00 : f32
    %12 = vector.broadcast %cst_9 : f32 to vector<16x64xf32>
    %13 = arith.addf %12, %11 : vector<16x64xf32>
    %14 = arith.divf %12, %13 : vector<16x64xf32>
    %15 = arith.mulf %6, %14 : vector<16x64xf32>
    %16 = arith.mulf %15, %9 : vector<16x64xf32>
    %17 = arith.truncf %16 : vector<16x64xf32> to vector<16x64xbf16>
    %c0_10 = arith.constant 0 : index
    %c0_11 = arith.constant 0 : index
    %18 = vector.load %arg8[%c0_10, %c0_11] : memref<16x32xf32, #tpu.memory_space<vmem>>, vector<16x32xf32>
    %c0_12 = arith.constant 0 : index
    %c0_13 = arith.constant 0 : index
    %c0_14 = arith.constant 0 : index
    %19 = vector.load %arg6[%c0_12, %c0_13, %c0_14] : memref<1x64x32xbf16, #tpu.memory_space<vmem>>, vector<1x64x32xbf16>
    %20 = vector.shape_cast %19 : vector<1x64x32xbf16> to vector<64x32xbf16>
    %cst_15 = arith.constant dense<0.000000e+00> : vector<16x32xf32>
    %21 = tpu.matmul %17, %20, %cst_15 {dimension_numbers = #tpu.dot_dimension_numbers<[1], [0], [0], [1], [0, 0, 1, 1], [], []>} : vector<16x64xbf16>, vector<64x32xbf16>, vector<16x32xf32> -> vector<16x32xf32>
    %22 = arith.addf %18, %21 : vector<16x32xf32>
    %c0_16 = arith.constant 0 : index
    %c0_17 = arith.constant 0 : index
    %23 = vector.load %arg8[%c0_16, %c0_17] : memref<16x32xf32, #tpu.memory_space<vmem>>, vector<16x32xf32>
    tpu.vector_store %arg8[%c0_16, %c0_17], %22 {strides = array<i32>} : memref<16x32xf32, #tpu.memory_space<vmem>>, vector<16x32xf32>,
    %c0_i32_18 = arith.constant 0 : i32
    %24 = arith.cmpi eq, %arg1, %c0_i32_18 : i32
    %25 = arith.extui %24 : i1 to i32
    %c0_i32_19 = arith.constant 0 : i32
    %26 = arith.cmpi ne, %25, %c0_i32_19 : i32
    scf.if %26 {
      %c0_20 = arith.constant 0 : index
      %c0_21 = arith.constant 0 : index
      %27 = vector.load %arg8[%c0_20, %c0_21] : memref<16x32xf32, #tpu.memory_space<vmem>>, vector<16x32xf32>
      %c0_22 = arith.constant 0 : index
      %c0_23 = arith.constant 0 : index
      %28 = vector.load %arg7[%c0_22, %c0_23] : memref<16x32xf32, #tpu.memory_space<vmem>>, vector<16x32xf32>
      tpu.vector_store %arg7[%c0_22, %c0_23], %27 {strides = array<i32>} : memref<16x32xf32, #tpu.memory_space<vmem>>, vector<16x32xf32>,
    } else {
    }
    return
  }
  func.func @transform_0(%arg0: i32, %arg1: i32, %arg2: memref<5xi32, #tpu.memory_space<smem>>) -> (i32, i32) {
    %c0_i32 = arith.constant 0 : i32
    %c0_i32_0 = arith.constant 0 : i32
    return %arg0, %c0_i32 : i32, i32
  }
  func.func @transform_1(%arg0: i32, %arg1: i32, %arg2: memref<5xi32, #tpu.memory_space<smem>>) -> (i32, i32, i32) {
    %0 = arith.index_cast %arg0 : i32 to index
    %1 = memref.load %arg2[%0] : memref<5xi32, #tpu.memory_space<smem>>
    %c0_i32 = arith.constant 0 : i32
    %c0_i32_0 = arith.constant 0 : i32
    return %1, %c0_i32, %arg1 : i32, i32, i32
  }
  func.func @transform_2(%arg0: i32, %arg1: i32, %arg2: memref<5xi32, #tpu.memory_space<smem>>) -> (i32, i32, i32) {
    %0 = arith.index_cast %arg0 : i32 to index
    %1 = memref.load %arg2[%0] : memref<5xi32, #tpu.memory_space<smem>>
    %c0_i32 = arith.constant 0 : i32
    %c0_i32_0 = arith.constant 0 : i32
    return %1, %c0_i32, %arg1 : i32, i32, i32
  }
  func.func @transform_3(%arg0: i32, %arg1: i32, %arg2: memref<5xi32, #tpu.memory_space<smem>>) -> (i32, i32, i32) {
    %0 = arith.index_cast %arg0 : i32 to index
    %1 = memref.load %arg2[%0] : memref<5xi32, #tpu.memory_space<smem>>
    %c0_i32 = arith.constant 0 : i32
    %c0_i32_0 = arith.constant 0 : i32
    return %1, %arg1, %c0_i32 : i32, i32, i32
  }
  func.func @transform_4(%arg0: i32, %arg1: i32, %arg2: memref<5xi32, #tpu.memory_space<smem>>) -> (i32, i32) {
    %c0_i32 = arith.constant 0 : i32
    %c0_i32_0 = arith.constant 0 : i32
    return %arg0, %c0_i32 : i32, i32
  }
}

</mosaic_0001>

<llo_original>
// kernel: sbase_moe_forward.1
$region0: #{sbase_moe_forward.1}
  #allocation0 [shape = 'u32[]', space=smem, size = 0x4, offset = 0x4, fixed_abs, tag = 'smem constant byte address 0x4 - core index']
  #allocation1 [shape = 'u32[144,128]{1,0:T(1,128)}', space=vmem, size = 0x12000, scoped, tag = 'internal scratch']
  #allocation2 [shape = 'f32[16,32]{1,0:T(8,128)}', space=vmem, size = 0x2000, scoped, tag = 'scratch operand']
  #allocation3 [shape = 's32[1]{0}', space=sflag, size = 0x4, scoped, tag = 'scoped memory for sbase_moe_forward.1']
  #allocation4 [shape = 'u8[512]{0}', space=smem, size = 0x200, scoped, tag = 'prefetched SMEM operand 0']
  %s0 = inlined_call_operand.hbm [shape: s32[5], index: 0, kind: input, shape index: {}]
  %s1 = inlined_call_operand.hbm [shape: bf16[80,32], index: 1, kind: input, shape index: {}]
  %s2 = inlined_call_operand.hbm [shape: bf16[4,32,64], index: 2, kind: input, shape index: {}]
  %s3 = inlined_call_operand.hbm [shape: bf16[4,32,64], index: 3, kind: input, shape index: {}]
  %s4 = inlined_call_operand.hbm [shape: bf16[4,64,32], index: 4, kind: input, shape index: {}]
  %s5 = inlined_call_operand.hbm [shape: f32[80,32], index: 5, kind: output, shape index: {}]
  %s6 = sld [smem:[#allocation0]]
  $region73: #{sbase_moe_forward.1} parent=0
    _
  %s8 = ssub.s32 1, %s6
  %s9 = scalar_select 0, %s8, %s6
  %11 = dma.hbm_to_smem %s0, 16, [#allocation4], [#allocation3]
  %12 = dma.done [#allocation3], 16
  %13 = sfence
  $region1: #{sbase_moe_forward.1} parent=0
    #allocation5 [shape = 'u8[8192]{0}', space=vmem, size = 0x2000, scoped, tag = 'input window, operand 1']
    #allocation6 [shape = 's32[2]{0}', space=sflag, size = 0x8, scoped, tag = 'scoped memory for sbase_moe_forward.1']
    #allocation7 [shape = 's32[2]{0}', space=sflag, size = 0x8, scoped, tag = 'scoped memory for sbase_moe_forward.1']
    #allocation8 [shape = 'u8[16384]{0}', space=vmem, size = 0x4000, scoped, tag = 'input window, operand 2']
    #allocation9 [shape = 's32[2]{0}', space=sflag, size = 0x8, scoped, tag = 'scoped memory for sbase_moe_forward.1']
    #allocation10 [shape = 'u8[16384]{0}', space=vmem, size = 0x4000, scoped, tag = 'input window, operand 3']
    #allocation11 [shape = 'u8[32768]{0}', space=vmem, size = 0x8000, scoped, tag = 'input window, operand 4']
    #allocation12 [shape = 's32[2]{0}', space=sflag, size = 0x8, scoped, tag = 'scoped memory for sbase_moe_forward.1']
    #allocation13 [shape = 'u8[16384]{0}', space=vmem, size = 0x4000, scoped, tag = 'output window, operand 0']
    %14 = vsyncpa [#allocation6], 0
    %s15 = scalar_lea.sflag [#allocation6], 1
    %16 = vsyncpa %s15, 0
    %17 = vsyncpa [#allocation9], 0
    %s18 = scalar_lea.sflag [#allocation9], 1
    %19 = vsyncpa %s18, 0
    %20 = vsyncpa [#allocation12], 0
    %s21 = scalar_lea.sflag [#allocation12], 1
    %22 = vsyncpa %s21, 0
    %23 = vsyncpa [#allocation7], 0
    %s24 = scalar_lea.sflag [#allocation7], 1
    %25 = vsyncpa %s24, 0
    loop: start=0, step=1, limit=7
    $region2: #{sbase_moe_forward.1} parent=1 // loop_pre_header
      _
    $region3: #{sbase_moe_forward.1} parent=1 // loop_header
      %s27 = sphi 0, %s31
      %p28 = scmp.ge.s32.totalorder %s27, 7
      %s34 = sphi 0, %s46
      %s35 = sphi 0, %s42
      %s36 = sphi 0, %s34
      %s37 = sphi 0, %s35
      %s38 = sphi 0, %s36
      %s39 = sphi 0, %s37
      %s49 = sphi 0, %s51
      %s52 = sphi 0, %s49
      %s53 = sphi 0, %s52
      %s69 = sphi 0, %s53
      %s79 = sphi 0, %s81
      %s82 = sphi 0, %s79
      %s83 = sphi 0, %s82
      %s99 = sphi 0, %s83
      %s109 = sphi 0, %s111
      %s112 = sphi 0, %s109
      %s113 = sphi 0, %s112
      %s129 = sphi 0, %s113
      %s139 = sphi 0, %s141
      %s142 = sphi 0, %s139
      %s143 = sphi 0, %s142
      %s159 = sphi 0, %s143
      %s165 = sphi 0, %s167
      %s168 = sphi 0, %s165
      %s169 = sphi 0, %s168
      %s185 = sphi 0, %s169
    $region4: #{sbase_moe_forward.1} parent=1 // loop_header_branch
      %30 = sbr.rel (%p28) target = $region8
    $region5: #{sbase_moe_forward.1} parent=1 // loop_body
      %s32 = ssub.s32 %s27, 1
      %s33 = ssub.s32 %s27, 2
      %s40 = sadd.s32 1, %s35
      %p41 = scmp.ge.s32.totalorder %s40, 1
      %s42 = scalar_select %p41, 0, %s40
      %s43 = sadd.s32 1, %s34
      %s44 = scalar_select %p41, %s43, %s34
      %p45 = scmp.ge.s32.totalorder %s44, 5
      %s46 = scalar_select %p45, 0, %s44
      %s47 = ssub.s32 %s34, %s46
      %p48 = scmp.eq.s32.totalorder %s47, 0
      %s50 = sadd.s32 %s49, 1
      %s51 = scalar_select %p48, %s49, %s50
      %p54 = pneg %p48
      %p55 = scmp.eq.s32.totalorder %s27, 4
      %p56 = por %p54, %p55
      %p57 = scmp.ne.s32.totalorder %s49, %s52
      %p58 = scmp.eq.s32.totalorder %s27, 0
      %p59 = por %p57, %p58
      %p60 = scmp.ne.s32.totalorder %s49, %s52
      %p61 = scmp.eq.s32.totalorder %s32, 4
      %p62 = por %p60, %p61
      %p63 = scmp.ne.s32.totalorder %s52, %s53
      %p64 = scmp.eq.s32.totalorder %s32, 0
      %p65 = por %p63, %p64
      %p66 = scmp.ne.s32.totalorder %s52, %s53
      %p67 = scmp.eq.s32.totalorder %s33, 4
      %p68 = por %p66, %p67
      %p70 = scmp.ne.s32.totalorder %s53, %s69
      %p71 = scmp.eq.s32.totalorder %s33, 0
      %p72 = por %p70, %p71
      %s73 = sld [smem:[#allocation4 + %s34]]
      %s74 = sld [smem:[#allocation4 + %s46]]
      %s75 = ssub.s32 %s73, %s74
      %s76 = ssub.s32 %s35, %s42
      %s77 = sor.u32 %s75, %s76
      %p78 = scmp.eq.s32.totalorder %s77, 0
      %s80 = sadd.s32 %s79, 1
      %s81 = scalar_select %p78, %s79, %s80
      %p84 = pneg %p78
      %p85 = scmp.eq.s32.totalorder %s27, 4
      %p86 = por %p84, %p85
      %p87 = scmp.ne.s32.totalorder %s79, %s82
      %p88 = scmp.eq.s32.totalorder %s27, 0
      %p89 = por %p87, %p88
      %p90 = scmp.ne.s32.totalorder %s79, %s82
      %p91 = scmp.eq.s32.totalorder %s32, 4
      %p92 = por %p90, %p91
      %p93 = scmp.ne.s32.totalorder %s82, %s83
      %p94 = scmp.eq.s32.totalorder %s32, 0
      %p95 = por %p93, %p94
      %p96 = scmp.ne.s32.totalorder %s82, %s83
      %p97 = scmp.eq.s32.totalorder %s33, 4
      %p98 = por %p96, %p97
      %p100 = scmp.ne.s32.totalorder %s83, %s99
      %p101 = scmp.eq.s32.totalorder %s33, 0
      %p102 = por %p100, %p101
      %s103 = sld [smem:[#allocation4 + %s34]]
      %s104 = sld [smem:[#allocation4 + %s46]]
      %s105 = ssub.s32 %s103, %s104
      %s106 = ssub.s32 %s35, %s42
      %s107 = sor.u32 %s105, %s106
      %p108 = scmp.eq.s32.totalorder %s107, 0
      %s110 = sadd.s32 %s109, 1
      %s111 = scalar_select %p108, %s109, %s110
      %p114 = pneg %p108
      %p115 = scmp.eq.s32.totalorder %s27, 4
      %p116 = por %p114, %p115
      %p117 = scmp.ne.s32.totalorder %s109, %s112
      %p118 = scmp.eq.s32.totalorder %s27, 0
      %p119 = por %p117, %p118
      %p120 = scmp.ne.s32.totalorder %s109, %s112
      %p121 = scmp.eq.s32.totalorder %s32, 4
      %p122 = por %p120, %p121
      %p123 = scmp.ne.s32.totalorder %s112, %s113
      %p124 = scmp.eq.s32.totalorder %s32, 0
      %p125 = por %p123, %p124
      %p126 = scmp.ne.s32.totalorder %s112, %s113
      %p127 = scmp.eq.s32.totalorder %s33, 4
      %p128 = por %p126, %p127
      %p130 = scmp.ne.s32.totalorder %s113, %s129
      %p131 = scmp.eq.s32.totalorder %s33, 0
      %p132 = por %p130, %p131
      %s133 = sld [smem:[#allocation4 + %s34]]
      %s134 = sld [smem:[#allocation4 + %s46]]
      %s135 = ssub.s32 %s133, %s134
      %s136 = ssub.s32 %s35, %s42
      %s137 = sor.u32 %s135, %s136
      %p138 = scmp.eq.s32.totalorder %s137, 0
      %s140 = sadd.s32 %s139, 1
      %s141 = scalar_select %p138, %s139, %s140
      %p144 = pneg %p138
      %p145 = scmp.eq.s32.totalorder %s27, 4
      %p146 = por %p144, %p145
      %p147 = scmp.ne.s32.totalorder %s139, %s142
      %p148 = scmp.eq.s32.totalorder %s27, 0
      %p149 = por %p147, %p148
      %p150 = scmp.ne.s32.totalorder %s139, %s142
      %p151 = scmp.eq.s32.totalorder %s32, 4
      %p152 = por %p150, %p151
      %p153 = scmp.ne.s32.totalorder %s142, %s143
      %p154 = scmp.eq.s32.totalorder %s32, 0
      %p155 = por %p153, %p154
      %p156 = scmp.ne.s32.totalorder %s142, %s143
      %p157 = scmp.eq.s32.totalorder %s33, 4
      %p158 = por %p156, %p157
      %p160 = scmp.ne.s32.totalorder %s143, %s159
      %p161 = scmp.eq.s32.totalorder %s33, 0
      %p162 = por %p160, %p161
      %s163 = ssub.s32 %s34, %s46
      %p164 = scmp.eq.s32.totalorder %s163, 0
      %s166 = sadd.s32 %s165, 1
      %s167 = scalar_select %p164, %s165, %s166
      %p170 = pneg %p164
      %p171 = scmp.eq.s32.totalorder %s27, 4
      %p172 = por %p170, %p171
      %p173 = scmp.ne.s32.totalorder %s165, %s168
      %p174 = scmp.eq.s32.totalorder %s27, 0
      %p175 = por %p173, %p174
      %p176 = scmp.ne.s32.totalorder %s165, %s168
      %p177 = scmp.eq.s32.totalorder %s32, 4
      %p178 = por %p176, %p177
      %p179 = scmp.ne.s32.totalorder %s168, %s169
      %p180 = scmp.eq.s32.totalorder %s32, 0
      %p181 = por %p179, %p180
      %p182 = scmp.ne.s32.totalorder %s168, %s169
      %p183 = scmp.eq.s32.totalorder %s33, 4
      %p184 = por %p182, %p183
      %p186 = scmp.ne.s32.totalorder %s169, %s185
      %p187 = scmp.eq.s32.totalorder %s33, 0
      %p188 = por %p186, %p187
      %p189 = scmp.le.s32.totalorder 1, %s27
      %p190 = scmp.lt.s32.totalorder %s27, 6
      %p191 = pnand %p189, %p190
      %p192 = pneg %p191
      // Predicated region
      $region9: #{sbase_moe_forward.1} parent=5 // pred_check
        _
      $region10: #{sbase_moe_forward.1} parent=5 // pred_check_branch
        %194 = sbr.rel (%p191) target = $region12
      $region11: #{sbase_moe_forward.1} parent=5 // pred_region
        %s195 = ssub.s32 %s27, 1
      $region12: #{sbase_moe_forward.1} parent=5 // pred_fallthru
        _
      %p196 = scmp.lt.s32.totalorder %s27, 5
      // Predicated region
      $region13: #{sbase_moe_forward.1} parent=5 // pred_check
        %p197 = pneg %p196
      $region14: #{sbase_moe_forward.1} parent=5 // pred_check_branch
        %199 = sbr.rel (%p197) target = $region16
      $region15: #{sbase_moe_forward.1} parent=5 // pred_region
        // Predicated region
        $region17: #{sbase_moe_forward.1} parent=15 // pred_check
          %p200 = pneg %p59
        $region18: #{sbase_moe_forward.1} parent=15 // pred_check_branch
          %202 = sbr.rel (%p200) target = $region20
        $region19: #{sbase_moe_forward.1} parent=15 // pred_region
          %s203 = sand.u32 %s49, 1
          %s204 = scalar_lea.sflag [#allocation6], %s203
          %s205 = sand.u32 %s49, 1
          %s206 = smul.addr %s205, 8
          %s207 = scalar_lea.vmem [#allocation5], %s206
          %s208 = smul.u32 2, %s34
          %s210 = ssub.s32 128, 128
          %211 = vsyncadd %s204, %s210
          %s212 = smul.addr %s208, 64
          %s213 = scalar_lea.hbm %s1, %s212
          %s214 = sshll.u32 %s207, 4
          %s215 = int_to_ptr.vmem [resolvable:$true] %s214
          %220 = dma.hbm_to_vmem [thread:$0]  %s213, 128, %s215, %s204, 64, 64, 4
        $region20: #{sbase_moe_forward.1} parent=15 // pred_fallthru
          _
        // Predicated region
        $region21: #{sbase_moe_forward.1} parent=15 // pred_check
          %p221 = pneg %p89
        $region22: #{sbase_moe_forward.1} parent=15 // pred_check_branch
          %223 = sbr.rel (%p221) target = $region24
        $region23: #{sbase_moe_forward.1} parent=15 // pred_region
          %s224 = sand.u32 %s27, 1
          %s225 = scalar_lea.sflag [#allocation9], %s224
          %s226 = sand.u32 %s79, 1
          %s227 = smul.addr %s226, 16
          %s228 = scalar_lea.vmem [#allocation8], %s227
          %s229 = sld [smem:[#allocation4 + %s34]]
          %s231 = ssub.s32 256, 256
          %232 = vsyncadd %s225, %s231
          %s233 = smul.addr %s229, 4
          %s234 = sadd.s32 %s35, %s233
          %s235 = smul.addr %s234, 64
          %s236 = scalar_lea.hbm %s2, %s235
          %s237 = sshll.u32 %s228, 4
          %s238 = int_to_ptr.vmem [resolvable:$true] %s237
          %243 = dma.hbm_to_vmem [thread:$0]  %s236, 256, %s238, %s225, 64, 64, 4
        $region24: #{sbase_moe_forward.1} parent=15 // pred_fallthru
          _
        // Predicated region
        $region25: #{sbase_moe_forward.1} parent=15 // pred_check
          %p244 = pneg %p119
        $region26: #{sbase_moe_forward.1} parent=15 // pred_check_branch
          %246 = sbr.rel (%p244) target = $region28
        $region27: #{sbase_moe_forward.1} parent=15 // pred_region
          %s247 = sand.u32 %s27, 1
          %s248 = scalar_lea.sflag [#allocation9], %s247
          %s249 = sand.u32 %s109, 1
          %s250 = smul.addr %s249, 16
          %s251 = scalar_lea.vmem [#allocation10], %s250
          %s252 = sld [smem:[#allocation4 + %s34]]
          %s254 = ssub.s32 256, 256
          %255 = vsyncadd %s248, %s254
          %s256 = smul.addr %s252, 4
          %s257 = sadd.s32 %s35, %s256
          %s258 = smul.addr %s257, 64
          %s259 = scalar_lea.hbm %s3, %s258
          %s260 = sshll.u32 %s251, 4
          %s261 = int_to_ptr.vmem [resolvable:$true] %s260
          %266 = dma.hbm_to_vmem [thread:$0]  %s259, 256, %s261, %s248, 64, 64, 4
        $region28: #{sbase_moe_forward.1} parent=15 // pred_fallthru
          _
        // Predicated region
        $region29: #{sbase_moe_forward.1} parent=15 // pred_check
          %p267 = pneg %p149
        $region30: #{sbase_moe_forward.1} parent=15 // pred_check_branch
          %269 = sbr.rel (%p267) target = $region32
        $region31: #{sbase_moe_forward.1} parent=15 // pred_region
          %s270 = sand.u32 %s139, 1
          %s271 = scalar_lea.sflag [#allocation12], %s270
          %s272 = sand.u32 %s139, 1
          %s273 = smul.addr %s272, 32
          %s274 = scalar_lea.vmem [#allocation11], %s273
          %s275 = sld [smem:[#allocation4 + %s34]]
          %s276 = smul.u32 8, %s35
          %s278 = ssub.s32 512, 512
          %279 = vsyncadd %s271, %s278
          %s280 = smul.addr %s275, 8
          %s281 = sadd.s32 %s276, %s280
          %s282 = smul.addr %s281, 64
          %s283 = scalar_lea.hbm %s4, %s282
          %s284 = sshll.u32 %s274, 4
          %s285 = int_to_ptr.vmem [resolvable:$true] %s284
          %290 = dma.hbm_to_vmem [thread:$0]  %s283, 512, %s285, %s271, 64, 64, 4
        $region32: #{sbase_moe_forward.1} parent=15 // pred_fallthru
          _
      $region16: #{sbase_moe_forward.1} parent=5 // pred_fallthru
        _
      %p291 = scmp.le.s32.totalorder 1, %s27
      %p292 = scmp.lt.s32.totalorder %s27, 6
      %p293 = pnand %p291, %p292
      %p294 = pneg %p293
      // Predicated region
      $region33: #{sbase_moe_forward.1} parent=5 // pred_check
        _
      $region34: #{sbase_moe_forward.1} parent=5 // pred_check_branch
        %296 = sbr.rel (%p293) target = $region36
      $region35: #{sbase_moe_forward.1} parent=5 // pred_region
        %s297 = ssub.s32 %s27, 1
        %s298 = sand.u32 %s52, 1
        %s299 = scalar_lea.sflag [#allocation6], %s298
        %s300 = sand.u32 %s52, 1
        %s301 = smul.addr %s300, 8
        %s302 = scalar_lea.vmem [#allocation5], %s301
        // Predicated region
        $region37: #{sbase_moe_forward.1} parent=35 // pred_check
          %p303 = pneg %p65
        $region38: #{sbase_moe_forward.1} parent=35 // pred_check_branch
          %305 = sbr.rel (%p303) target = $region40
        $region39: #{sbase_moe_forward.1} parent=35 // pred_region
          %306 = dma.done %s299, 128
        $region40: #{sbase_moe_forward.1} parent=35 // pred_fallthru
          _
        %s307 = sand.u32 %s32, 1
        %s308 = scalar_lea.sflag [#allocation9], %s307
        %s309 = sand.u32 %s82, 1
        %s310 = smul.addr %s309, 16
        %s311 = scalar_lea.vmem [#allocation8], %s310
        // Predicated region
        $region41: #{sbase_moe_forward.1} parent=35 // pred_check
          %p312 = pneg %p95
        $region42: #{sbase_moe_forward.1} parent=35 // pred_check_branch
          %314 = sbr.rel (%p312) target = $region44
        $region43: #{sbase_moe_forward.1} parent=35 // pred_region
          %315 = dma.done %s308, 256
        $region44: #{sbase_moe_forward.1} parent=35 // pred_fallthru
          _
        %s316 = sand.u32 %s32, 1
        %s317 = scalar_lea.sflag [#allocation9], %s316
        %s318 = sand.u32 %s112, 1
        %s319 = smul.addr %s318, 16
        %s320 = scalar_lea.vmem [#allocation10], %s319
        // Predicated region
        $region45: #{sbase_moe_forward.1} parent=35 // pred_check
          %p321 = pneg %p125
        $region46: #{sbase_moe_forward.1} parent=35 // pred_check_branch
          %323 = sbr.rel (%p321) target = $region48
        $region47: #{sbase_moe_forward.1} parent=35 // pred_region
          %324 = dma.done %s317, 256
        $region48: #{sbase_moe_forward.1} parent=35 // pred_fallthru
          _
        %s325 = sand.u32 %s142, 1
        %s326 = scalar_lea.sflag [#allocation12], %s325
        %s327 = sand.u32 %s142, 1
        %s328 = smul.addr %s327, 32
        %s329 = scalar_lea.vmem [#allocation11], %s328
        // Predicated region
        $region49: #{sbase_moe_forward.1} parent=35 // pred_check
          %p330 = pneg %p155
        $region50: #{sbase_moe_forward.1} parent=35 // pred_check_branch
          %332 = sbr.rel (%p330) target = $region52
        $region51: #{sbase_moe_forward.1} parent=35 // pred_region
          %333 = dma.done %s326, 512
        $region52: #{sbase_moe_forward.1} parent=35 // pred_fallthru
          _
        %s334 = sand.u32 %s52, 1
        %s335 = scalar_lea.sflag [#allocation6], %s334
        %s336 = sand.u32 %s52, 1
        %s337 = smul.addr %s336, 8
        %s338 = scalar_lea.vmem [#allocation5], %s337
        %p339 = pneg %p65
        %p340 = pneg %p62
        %s341 = sand.u32 %s32, 1
        %s342 = scalar_lea.sflag [#allocation9], %s341
        %s343 = sand.u32 %s82, 1
        %s344 = smul.addr %s343, 16
        %s345 = scalar_lea.vmem [#allocation8], %s344
        %p346 = pneg %p95
        %p347 = pneg %p92
        %s348 = sand.u32 %s32, 1
        %s349 = scalar_lea.sflag [#allocation9], %s348
        %s350 = sand.u32 %s112, 1
        %s351 = smul.addr %s350, 16
        %s352 = scalar_lea.vmem [#allocation10], %s351
        %p353 = pneg %p125
        %p354 = pneg %p122
        %s355 = sand.u32 %s142, 1
        %s356 = scalar_lea.sflag [#allocation12], %s355
        %s357 = sand.u32 %s142, 1
        %s358 = smul.addr %s357, 32
        %s359 = scalar_lea.vmem [#allocation11], %s358
        %p360 = pneg %p155
        %p361 = pneg %p152
        %p362 = pneg %p181
        %p363 = pneg %p178
        %s364 = sand.u32 %s168, 1
        %s365 = scalar_lea.sflag [#allocation7], %s364
        %s366 = sand.u32 %s168, 1
        %s367 = smul.addr %s366, 16
        %s368 = scalar_lea.vmem [#allocation13], %s367
        %s369 = smul.u32 2, %s36
        %s370 = sld [smem:[#allocation4 + %s36]]
        %s371 = sld [smem:[#allocation4 + %s36]]
        %s372 = sld [smem:[#allocation4 + %s36]]
        %s373 = smul.u32 8, %s37
        %s374 = smul.u32 2, %s36
        %p376 = scmp.eq.s32.totalorder %s37, 0
        // Predicated region
        $region53: #{sbase_moe_forward.1} parent=35 // pred_check
          %p377 = pneg %p376
        $region54: #{sbase_moe_forward.1} parent=35 // pred_check_branch
          %379 = sbr.rel (%p377) target = $region56
        $region55: #{sbase_moe_forward.1} parent=35 // pred_region
          %vm380 = vcmask 261120
          %381 = vst.msk [vmem:[#allocation2] sm:$0xff] %vm380, 0.0
          %382 = vst.msk [vmem:[#allocation2 + $0x8] sm:$0xff] %vm380, 0.0
        $region56: #{sbase_moe_forward.1} parent=35 // pred_fallthru
          _
        %v383 = vld [vmem:[%s302] sm:$0xf]
        %v384 = vld [vmem:[%s302 + $0x4] sm:$0xf]
        %v385 = vld [vmem:[%s311] sm:$0xf]
        %v386 = vld [vmem:[%s311 + $0x4] sm:$0xf]
        %v387 = vld [vmem:[%s311 + $0x8] sm:$0xf]
        %v388 = vld [vmem:[%s311 + $0xc] sm:$0xf]
        %v391 = vunpack.c.l.b16 %v383
        %v392 = vunpack.c.l.b16 %v384
        %v393 = vpack.c.b16 %v392, %v391
        %v398 = vunpack.c.l.b16 %v385
        %v399 = vunpack.c.l.b16 %v386
        %v400 = vunpack.c.l.b16 %v387
        %v401 = vunpack.c.l.b16 %v388
        %v402 = vpack.c.b16 %v399, %v398
        %v403 = vpack.c.b16 %v401, %v400
        %vm406 = vcmask 261120
        %v408 = vsel %vm406, %v393, 0
        %410 = vmatprep.subr.bf16.mxu0 0
        %411 = vmatpush1.bf16.msra.mxu0 %v402
        %412 = vmatprep.subr.bf16.mxu0 0
        %413 = vmatpush1.bf16.msra.mxu0 %v403
        %414 = vmatprep.subr.bf16.mxu0 0
        %415 = vmatpush1.bf16.msra.mxu0 0
        %416 = vmatprep.subr.bf16.mxu0 0
        %417 = vmatpush1.bf16.msra.mxu0 0
        %418 = vmatprep.subr.bf16.mxu0 0
        %419 = vmatpush1.bf16.msra.mxu0 0
        %420 = vmatprep.subr.bf16.mxu0 0
        %421 = vmatpush1.bf16.msra.mxu0 0
        %422 = vmatprep.subr.bf16.mxu0 0
        %423 = vmatpush1.bf16.msra.mxu0 0
        %424 = vmatprep.subr.bf16.mxu0 0
        %425 = vmatpush1.bf16.msra.mxu0 0
        %426 = vmatprep.subr.bf16.mxu0 0
        %427 = vmatpush1.bf16.msra.mxu0 0
        %428 = vmatprep.subr.bf16.mxu0 0
        %429 = vmatpush1.bf16.msra.mxu0 0
        %430 = vmatprep.subr.bf16.mxu0 0
        %431 = vmatpush1.bf16.msra.mxu0 0
        %432 = vmatprep.subr.bf16.mxu0 0
        %433 = vmatpush1.bf16.msra.mxu0 0
        %434 = vmatprep.subr.bf16.mxu0 0
        %435 = vmatpush1.bf16.msra.mxu0 0
        %436 = vmatprep.subr.bf16.mxu0 0
        %437 = vmatpush1.bf16.msra.mxu0 0
        %438 = vmatprep.subr.bf16.mxu0 0
        %439 = vmatpush1.bf16.msra.mxu0 0
        %440 = vmatprep.subr.bf16.mxu0 0
        %441 = vmatpush1.bf16.msra.mxu0 0
        %442 = vmatprep.mubr.bf16.mxu0 0
        %443 = vmatmul.mubr.bf16.gmra.mrb[0].mxu0 %v408
        %v444 = vpop.f32.mrb[0].mxu0
        %v445 = vadd.f32 0.0, %v444
        %v446 = vpop.f32.mrb[0].mxu0
        %v447 = vpop.f32.mrb[0].mxu0
        %v448 = vadd.f32 0.0, %v447
        %v449 = vpop.f32.mrb[0].mxu0
        %450 = vdwg.mxu0
        %v451 = vld [vmem:[%s320] sm:$0xf]
        %v452 = vld [vmem:[%s320 + $0x4] sm:$0xf]
        %v453 = vld [vmem:[%s320 + $0x8] sm:$0xf]
        %v454 = vld [vmem:[%s320 + $0xc] sm:$0xf]
        %v459 = vunpack.c.l.b16 %v451
        %v460 = vunpack.c.l.b16 %v452
        %v461 = vunpack.c.l.b16 %v453
        %v462 = vunpack.c.l.b16 %v454
        %v463 = vpack.c.b16 %v460, %v459
        %v464 = vpack.c.b16 %v462, %v461
        %467 = vmatprep.subr.bf16.mxu0 0
        %468 = vmatpush1.bf16.msra.mxu0 %v463
        %469 = vmatprep.subr.bf16.mxu0 0
        %470 = vmatpush1.bf16.msra.mxu0 %v464
        %471 = vmatprep.subr.bf16.mxu0 0
        %472 = vmatpush1.bf16.msra.mxu0 0
        %473 = vmatprep.subr.bf16.mxu0 0
        %474 = vmatpush1.bf16.msra.mxu0 0
        %475 = vmatprep.subr.bf16.mxu0 0
        %476 = vmatpush1.bf16.msra.mxu0 0
        %477 = vmatprep.subr.bf16.mxu0 0
        %478 = vmatpush1.bf16.msra.mxu0 0
        %479 = vmatprep.subr.bf16.mxu0 0
        %480 = vmatpush1.bf16.msra.mxu0 0
        %481 = vmatprep.subr.bf16.mxu0 0
        %482 = vmatpush1.bf16.msra.mxu0 0
        %483 = vmatprep.subr.bf16.mxu0 0
        %484 = vmatpush1.bf16.msra.mxu0 0
        %485 = vmatprep.subr.bf16.mxu0 0
        %486 = vmatpush1.bf16.msra.mxu0 0
        %487 = vmatprep.subr.bf16.mxu0 0
        %488 = vmatpush1.bf16.msra.mxu0 0
        %489 = vmatprep.subr.bf16.mxu0 0
        %490 = vmatpush1.bf16.msra.mxu0 0
        %491 = vmatprep.subr.bf16.mxu0 0
        %492 = vmatpush1.bf16.msra.mxu0 0
        %493 = vmatprep.subr.bf16.mxu0 0
        %494 = vmatpush1.bf16.msra.mxu0 0
        %495 = vmatprep.subr.bf16.mxu0 0
        %496 = vmatpush1.bf16.msra.mxu0 0
        %497 = vmatprep.subr.bf16.mxu0 0
        %498 = vmatpush1.bf16.msra.mxu0 0
        %499 = vmatprep.mubr.bf16.mxu0 0
        %500 = vmatmul.mubr.bf16.gmra.mrb[0].mxu0 %v408
        %v501 = vpop.f32.mrb[0].mxu0
        %v502 = vadd.f32 0.0, %v501
        %v503 = vpop.f32.mrb[0].mxu0
        %v504 = vpop.f32.mrb[0].mxu0
        %v505 = vadd.f32 0.0, %v504
        %v506 = vpop.f32.mrb[0].mxu0
        %507 = vdwg.mxu0
        %v508 = vxor.u32 %v445, 2147483648
        %v509 = vxor.u32 %v448, 2147483648
        %v510 = vmul.f32 %v508, 1.442695
        %v511 = vpow.pop %v510
        %v512 = vmul.f32 %v509, 1.442695
        %v513 = vpow.pop %v512
        %v514 = vadd.f32 %v511, 1.0
        %v515 = vadd.f32 %v513, 1.0
        %v516 = vrcp.pop %v514
        %v517 = vmul.f32 1.0, %v516
        %v518 = vrcp.pop %v515
        %v519 = vmul.f32 1.0, %v518
        %v520 = vmul.f32 %v445, %v517
        %v521 = vmul.f32 %v448, %v519
        %v522 = vmul.f32 %v520, %v502
        %v523 = vmul.f32 %v521, %v505
        %v524 = vpack.c.bf16 %v523, %v522
        %v525 = vld [vmem:[#allocation2] sm:$0xff]
        %v526 = vld [vmem:[#allocation2 + $0x8] sm:$0xff]
        %v527 = vld [vmem:[%s329] sm:$0xf]
        %v528 = vld [vmem:[%s329 + $0x4] sm:$0xf]
        %v529 = vld [vmem:[%s329 + $0x8] sm:$0xf]
        %v530 = vld [vmem:[%s329 + $0xc] sm:$0xf]
        %v531 = vld [vmem:[%s329 + $0x10] sm:$0xf]
        %v532 = vld [vmem:[%s329 + $0x14] sm:$0xf]
        %v533 = vld [vmem:[%s329 + $0x18] sm:$0xf]
        %v534 = vld [vmem:[%s329 + $0x1c] sm:$0xf]
        %v543 = vunpack.c.l.b16 %v527
        %v544 = vunpack.c.l.b16 %v528
        %v545 = vunpack.c.l.b16 %v529
        %v546 = vunpack.c.l.b16 %v530
        %v547 = vunpack.c.l.b16 %v531
        %v548 = vunpack.c.l.b16 %v532
        %v549 = vunpack.c.l.b16 %v533
        %v550 = vunpack.c.l.b16 %v534
        %v551 = vpack.c.b16 %v544, %v543
        %v552 = vpack.c.b16 %v546, %v545
        %v553 = vpack.c.b16 %v548, %v547
        %v554 = vpack.c.b16 %v550, %v549
        %vm559 = vcmask 523264
        %v561 = vsel %vm559, %v524, 0
        %563 = vmatprep.subr.bf16.mxu0 0
        %564 = vmatpush1.bf16.msra.mxu0 %v551
        %565 = vmatprep.subr.bf16.mxu0 0
        %566 = vmatpush1.bf16.msra.mxu0 %v552
        %567 = vmatprep.subr.bf16.mxu0 0
        %568 = vmatpush1.bf16.msra.mxu0 %v553
        %569 = vmatprep.subr.bf16.mxu0 0
        %570 = vmatpush1.bf16.msra.mxu0 %v554
        %571 = vmatprep.subr.bf16.mxu0 0
        %572 = vmatpush1.bf16.msra.mxu0 0
        %573 = vmatprep.subr.bf16.mxu0 0
        %574 = vmatpush1.bf16.msra.mxu0 0
        %575 = vmatprep.subr.bf16.mxu0 0
        %576 = vmatpush1.bf16.msra.mxu0 0
        %577 = vmatprep.subr.bf16.mxu0 0
        %578 = vmatpush1.bf16.msra.mxu0 0
        %579 = vmatprep.subr.bf16.mxu0 0
        %580 = vmatpush1.bf16.msra.mxu0 0
        %581 = vmatprep.subr.bf16.mxu0 0
        %582 = vmatpush1.bf16.msra.mxu0 0
        %583 = vmatprep.subr.bf16.mxu0 0
        %584 = vmatpush1.bf16.msra.mxu0 0
        %585 = vmatprep.subr.bf16.mxu0 0
        %586 = vmatpush1.bf16.msra.mxu0 0
        %587 = vmatprep.subr.bf16.mxu0 0
        %588 = vmatpush1.bf16.msra.mxu0 0
        %589 = vmatprep.subr.bf16.mxu0 0
        %590 = vmatpush1.bf16.msra.mxu0 0
        %591 = vmatprep.subr.bf16.mxu0 0
        %592 = vmatpush1.bf16.msra.mxu0 0
        %593 = vmatprep.subr.bf16.mxu0 0
        %594 = vmatpush1.bf16.msra.mxu0 0
        %595 = vmatprep.mubr.bf16.mxu0 0
        %596 = vmatmul.mubr.bf16.gmra.mrb[0].mxu0 %v561
        %v597 = vpop.f32.mrb[0].mxu0
        %v598 = vadd.f32 0.0, %v597
        %v599 = vpop.f32.mrb[0].mxu0
        %v600 = vpop.f32.mrb[0].mxu0
        %v601 = vadd.f32 0.0, %v600
        %v602 = vpop.f32.mrb[0].mxu0
        %603 = vdwg.mxu0
        %v604 = vadd.f32 %v525, %v598
        %v605 = vadd.f32 %v526, %v601
        %606 = vst.msk [vmem:[#allocation2] sm:$0xff] %vm406, %v604
        %607 = vst.msk [vmem:[#allocation2 + $0x8] sm:$0xff] %vm406, %v605
        // Predicated region
        $region57: #{sbase_moe_forward.1} parent=35 // pred_check
          %p608 = pneg %p376
        $region58: #{sbase_moe_forward.1} parent=35 // pred_check_branch
          %610 = sbr.rel (%p608) target = $region60
        $region59: #{sbase_moe_forward.1} parent=35 // pred_region
          %v611 = vld [vmem:[#allocation2] sm:$0xff]
          %v612 = vld [vmem:[#allocation2 + $0x8] sm:$0xff]
          %613 = vst.msk [vmem:[%s368] sm:$0xff] %vm406, %v611
          %614 = vst.msk [vmem:[%s368 + $0x8] sm:$0xff] %vm406, %v612
        $region60: #{sbase_moe_forward.1} parent=35 // pred_fallthru
          _
        %s615 = sand.u32 %s168, 1
        %s616 = scalar_lea.sflag [#allocation7], %s615
        %s617 = sand.u32 %s168, 1
        %s618 = smul.addr %s617, 16
        %s619 = scalar_lea.vmem [#allocation13], %s618
        // Predicated region
        $region61: #{sbase_moe_forward.1} parent=35 // pred_check
          %p620 = pneg %p178
        $region62: #{sbase_moe_forward.1} parent=35 // pred_check_branch
          %622 = sbr.rel (%p620) target = $region64
        $region63: #{sbase_moe_forward.1} parent=35 // pred_region
          %s623 = smul.u32 2, %s36
          %s625 = ssub.s32 256, 256
          %626 = vsyncadd %s616, %s625
          %s627 = smul.addr %s623, 128
          %s628 = scalar_lea.hbm %s5, %s627
          %s629 = sshll.u32 %s619, 4
          %s630 = int_to_ptr.vmem [resolvable:$true] %s629
          %635 = dma.vmem_to_hbm [thread:$0]  %s630, 256, %s628, %s616, 128, 128, 8
        $region64: #{sbase_moe_forward.1} parent=35 // pred_fallthru
          _
      $region36: #{sbase_moe_forward.1} parent=5 // pred_fallthru
        _
      %p636 = scmp.le.s32.totalorder 2, %s27
      // Predicated region
      $region65: #{sbase_moe_forward.1} parent=5 // pred_check
        %p637 = pneg %p636
      $region66: #{sbase_moe_forward.1} parent=5 // pred_check_branch
        %639 = sbr.rel (%p637) target = $region68
      $region67: #{sbase_moe_forward.1} parent=5 // pred_region
        %s640 = ssub.s32 %s27, 2
        // Predicated region
        $region69: #{sbase_moe_forward.1} parent=67 // pred_check
          %p641 = pneg %p184
        $region70: #{sbase_moe_forward.1} parent=67 // pred_check_branch
          %643 = sbr.rel (%p641) target = $region72
        $region71: #{sbase_moe_forward.1} parent=67 // pred_region
          %s644 = sand.u32 %s169, 1
          %s645 = scalar_lea.sflag [#allocation7], %s644
          %s646 = sand.u32 %s169, 1
          %s647 = smul.addr %s646, 16
          %s648 = scalar_lea.vmem [#allocation13], %s647
          %649 = dma.done %s645, 256
        $region72: #{sbase_moe_forward.1} parent=67 // pred_fallthru
          _
      $region68: #{sbase_moe_forward.1} parent=5 // pred_fallthru
        _
    $region6: #{sbase_moe_forward.1} parent=1 // loop_footer
      %s31 = sadd.s32 1, %s27
    $region7: #{sbase_moe_forward.1} parent=1 // loop_footer_branch
      %26 = sbr.rel target = $region3
    $region8: #{sbase_moe_forward.1} parent=1 // loop_exit
      _
    %650 = vsyncpa [#allocation6], 1
    %s651 = scalar_lea.sflag [#allocation6], 1
    %652 = vsyncpa %s651, 1
    %653 = vsyncpa [#allocation9], 1
    %s654 = scalar_lea.sflag [#allocation9], 1
    %655 = vsyncpa %s654, 1
    %656 = vsyncpa [#allocation12], 1
    %s657 = scalar_lea.sflag [#allocation12], 1
    %658 = vsyncpa %s657, 1
    %659 = vsyncpa [#allocation7], 1
    %s660 = scalar_lea.sflag [#allocation7], 1
    %661 = vsyncpa %s660, 1

</llo_original>
